<compile_context>
chip_gen: v5e
topology: v5e:2x2
jax: 0.10.0
libtpu: 0.0.40
codegen_flags: <defaults>
</compile_context>

<pallas_src>
import jax
import jax.numpy as jnp
from jax import lax
from jax.experimental import pallas as pl
from jax.experimental.pallas import tpu as pltpu

# Hyperparameters consistent with the tutorial's TextCNN.
VOCAB_SIZE = 16
EMBEDDING_SIZE = 32
SEQUENCE_LENGTH = 8
NUM_CLASSES = 2
FILTER_SIZES = (2, 3, 4)          # consecutive sizes (used by the mask formula)
NUM_FILTERS = 4
BATCH = 2
NUM_FILTERS_TOTAL = NUM_FILTERS * len(FILTER_SIZES)   # 12

MAX_FS = max(FILTER_SIZES)
LANES = 128
VOCAB_PAD = 128                   # pad vocab so the one-hot gather is lane-dense (K = 128)
K_CONV = MAX_FS * EMBEDDING_SIZE  # 128: im2col contraction width
N_COLS = 16                       # conv output channels (12) padded to a sublane multiple

B_TILE = 32                       # samples per grid step -> 256 im2col rows per MXU pass
ROWS = B_TILE * SEQUENCE_LENGTH   # 256

# Row layout of the packed f32 parameter slab (all offsets 8-aligned), 80x128 = 40 KiB.
ROW_TABLE_T = 0                              # [ 0, 32): embedding table TRANSPOSED (E, vocab_pad)
ROW_WCONV_T = ROW_TABLE_T + EMBEDDING_SIZE   # [32, 48): im2col conv weight TRANSPOSED (out_col, K)
ROW_WLIN = ROW_WCONV_T + N_COLS              # [48, 64): linear weight (pooled_col, class)
ROW_MASK = ROW_WLIN + N_COLS                 # [64, 72): time/filter validity mask (S, N_COLS)
ROW_BIAS = ROW_MASK + SEQUENCE_LENGTH        # [72, 80): row 72 = conv bias, row 73 = linear bias
PACK_ROWS = ROW_BIAS + 8                     # 80


def textcnn_kernel(ids_ref, wp_ref, out_ref):
    # ---- 1) Embedding lookup as a one-hot matmul (exact, f32, K = 128). ----
    ids = ids_ref[...]                                                   # (ROWS, 1) int32
    vocab_iota = lax.broadcasted_iota(jnp.int32, (ROWS, VOCAB_PAD), 1)
    onehot = (vocab_iota == ids).astype(jnp.float32)                     # (ROWS, 128)
    table_t = wp_ref[ROW_TABLE_T:ROW_TABLE_T + EMBEDDING_SIZE, :]        # (32, 128) = emb.T
    emb = lax.dot_general(onehot, table_t,
                          dimension_numbers=(((1,), (1,)), ((), ())),
                          preferred_element_type=jnp.float32)            # (ROWS, 32)

    # ---- 2) im2col via XLU sublane rolls: tap-j block of row r holds emb[r + j]. ----
    # Rolled-in rows (next sample / wrap to tile start) only reach (row, tap)
    # pairs whose tap weight is zero or whose time row is masked before the pool.
    parts = [emb]
    for j in range(1, MAX_FS):
        parts.append(pltpu.roll(emb, ROWS - j, 0))                       # row r <- emb[r + j]
    x = jnp.concatenate(parts, axis=1).astype(jnp.bfloat16)              # (ROWS, 128)

    # ---- 3) All three convolutions as ONE bf16 matmul (K = 128, N = 16). ----
    w_conv_t = wp_ref[ROW_WCONV_T:ROW_WCONV_T + N_COLS, :].astype(jnp.bfloat16)  # (16, 128)
    conv = lax.dot_general(x, w_conv_t,
                           dimension_numbers=(((1,), (1,)), ((), ())),
                           preferred_element_type=jnp.float32)           # (ROWS, 16)
    b_conv = wp_ref[ROW_BIAS:ROW_BIAS + 1, 0:N_COLS]                     # (1, 16)
    h = jnp.maximum(conv + b_conv, 0.0)                                  # ReLU(conv + bias)

    # ---- 4) Precomputed validity mask (0/1), then max-pool over time. ----
    # Masking to 0 is safe because ReLU already made every valid output >= 0.
    mask = wp_ref[ROW_MASK:ROW_MASK + SEQUENCE_LENGTH, 0:N_COLS]         # (8, 16)
    h3 = h.reshape(B_TILE, SEQUENCE_LENGTH, N_COLS) * mask[None, :, :]
    pooled = jnp.max(h3, axis=1)                                         # (B_TILE, 16)

    # ---- 5) Classifier (bf16 MXU, K = 16), lane-dense (B_TILE, 128) store. ----
    w_lin = wp_ref[ROW_WLIN:ROW_WLIN + N_COLS, :].astype(jnp.bfloat16)   # (16, 128)
    b_lin = wp_ref[ROW_BIAS + 1:ROW_BIAS + 2, :]                         # (1, 128)
    out_ref[...] = jnp.dot(pooled.astype(jnp.bfloat16), w_lin,
                           preferred_element_type=jnp.float32) + b_lin


def prepare_params(params):
    """One-time packing of all float parameters into one dense (80, 128) f32 slab."""
    # The junk-masking argument and fs_of_col formula assume consecutive filter sizes.
    assert FILTER_SIZES == tuple(range(FILTER_SIZES[0],
                                       FILTER_SIZES[0] + len(FILTER_SIZES))), FILTER_SIZES
    assert NUM_FILTERS_TOTAL <= N_COLS

    pack = jnp.zeros((PACK_ROWS, LANES), jnp.float32)

    # Embedding table stored transposed: (E, vocab padded to 128 lanes).
    pack = pack.at[ROW_TABLE_T:ROW_TABLE_T + EMBEDDING_SIZE, :VOCAB_SIZE].set(params["emb"].T)

    # Combined im2col conv weight, stored TRANSPOSED (out_col, tap*E):
    # out_col = fs_block*NUM_FILTERS + f; taps j >= fs are zero.
    blocks = []
    for i, fs in enumerate(FILTER_SIZES):
        w = jnp.transpose(params["conv_w"][i], (1, 2, 0))        # (fs, E, F)
        w = jnp.pad(w, ((0, MAX_FS - fs), (0, 0), (0, 0)))       # (MAX_FS, E, F)
        blocks.append(w.reshape(K_CONV, NUM_FILTERS))
    w_conv = jnp.concatenate(blocks, axis=1)                     # (128, 12)
    pack = pack.at[ROW_WCONV_T:ROW_WCONV_T + NUM_FILTERS_TOTAL, :K_CONV].set(w_conv.T)

    # Linear weight pre-transposed to (NUM_FILTERS_TOTAL, NUM_CLASSES).
    pack = pack.at[ROW_WLIN:ROW_WLIN + NUM_FILTERS_TOTAL, :NUM_CLASSES].set(params["lin_w"].T)

    # Batch-invariant validity mask: 1.0 where t < S - fs + 1 for the column's fs block.
    t = jnp.arange(SEQUENCE_LENGTH)[:, None]
    col = jnp.arange(N_COLS)[None, :]
    fs_of_col = FILTER_SIZES[0] + col // NUM_FILTERS
    valid = (t < SEQUENCE_LENGTH - fs_of_col + 1) & (col < NUM_FILTERS_TOTAL)
    pack = pack.at[ROW_MASK:ROW_MASK + SEQUENCE_LENGTH, :N_COLS].set(valid.astype(jnp.float32))

    # Biases (conv bias in fs-major order, matching the column layout above).
    b_conv = jnp.concatenate([params["conv_b"][i][0] for i in range(len(FILTER_SIZES))])
    pack = pack.at[ROW_BIAS, :NUM_FILTERS_TOTAL].set(b_conv)
    pack = pack.at[ROW_BIAS + 1, :NUM_CLASSES].set(params["lin_b"][0])
    return pack


def textcnn_forward(x_ids, params_pack):
    b = x_ids.shape[0]
    num_tiles = pl.cdiv(b, B_TILE)
    b_pad = num_tiles * B_TILE
    ids = jnp.zeros((b_pad, SEQUENCE_LENGTH), jnp.int32).at[:b].set(x_ids.astype(jnp.int32))
    ids2d = ids.reshape(b_pad * SEQUENCE_LENGTH, 1)
    out = pl.pallas_call(
        textcnn_kernel,
        out_shape=jax.ShapeDtypeStruct((b_pad, LANES), jnp.float32),
        grid=(num_tiles,),
        in_specs=[
            pl.BlockSpec((ROWS, 1), lambda i: (i, 0)),            # per-tile token ids
            pl.BlockSpec((PACK_ROWS, LANES), lambda i: (0, 0)),   # weight slab: VMEM-resident
        ],
        out_specs=pl.BlockSpec((B_TILE, LANES), lambda i: (i, 0)),
        compiler_params=pltpu.CompilerParams(dimension_semantics=("parallel",)),
    )(ids2d, params_pack)
    return out[:b, :NUM_CLASSES]


def init_params(key):
    keys = jax.random.split(key, 8)
    emb = 0.1 * jax.random.normal(keys[0], (VOCAB_SIZE, EMBEDDING_SIZE), jnp.float32)
    conv_w, conv_b = [], []
    for i, fs in enumerate(FILTER_SIZES):
        conv_w.append(0.1 * jax.random.normal(
            keys[1 + i], (NUM_FILTERS, fs, EMBEDDING_SIZE), jnp.float32))
        conv_b.append(0.1 * jax.random.normal(
            keys[4 + i], (1, NUM_FILTERS), jnp.float32))
    lin_w = 0.1 * jax.random.normal(keys[7], (NUM_CLASSES, NUM_FILTERS_TOTAL), jnp.float32)
    lin_b = jnp.ones((1, NUM_CLASSES), jnp.float32)  # nn.Parameter(torch.ones([num_classes]))
    return {"emb": emb, "conv_w": conv_w, "conv_b": conv_b,
            "lin_w": lin_w, "lin_b": lin_b}


def textcnn_reference(x_ids, params):
    # Pure-JAX f32 reference mirroring the PyTorch forward, for correctness check.
    embedded = jnp.take(params["emb"], x_ids, axis=0)
    pooled = []
    for i, fs in enumerate(FILTER_SIZES):
        w, b = params["conv_w"][i], params["conv_b"][i][0]
        t_out = SEQUENCE_LENGTH - fs + 1
        h = jnp.stack(
            [jnp.einsum("bje,fje->bf", embedded[:, t:t + fs, :], w) for t in range(t_out)],
            axis=1)
        h = jax.nn.relu(h + b)
        pooled.append(jnp.max(h, axis=1))
    flat = jnp.concatenate(pooled, axis=1)
    return flat @ params["lin_w"].T + params["lin_b"][0]


if __name__ == "__main__":
    key = jax.random.PRNGKey(0)
    pkey, xkey, xkey_big = jax.random.split(key, 3)
    params = init_params(pkey)
    params_pack = jax.block_until_ready(prepare_params(params))  # one-time weight packing

    # Tutorial-sized batch (B = 2).
    x_ids = jax.random.randint(xkey, (BATCH, SEQUENCE_LENGTH), 0, VOCAB_SIZE, dtype=jnp.int32)
    out = jax.block_until_ready(textcnn_forward(x_ids, params_pack))
    ref = textcnn_reference(x_ids, params)
    assert out.shape == (BATCH, NUM_CLASSES), out.shape
    # bf16 MXU operands vs. the f32 reference -> relaxed tolerance (per perf review).
    assert jnp.allclose(out, ref, atol=2e-2, rtol=2e-2), (out, ref)

    # Larger batch exercising the multi-step "parallel" batch grid (weights resident).
    big_b = 3 * B_TILE + 5
    x_big = jax.random.randint(xkey_big, (big_b, SEQUENCE_LENGTH), 0, VOCAB_SIZE, dtype=jnp.int32)
    out_big = jax.block_until_ready(textcnn_forward(x_big, params_pack))
    ref_big = textcnn_reference(x_big, params)
    assert out_big.shape == (big_b, NUM_CLASSES), out_big.shape
    assert jnp.allclose(out_big, ref_big, atol=2e-2, rtol=2e-2)

    print("KERNEL_OK")
</pallas_src>

<mosaic_0001>
module attributes {stable_mosaic.version = 11 : i64} {
  func.func @textcnn_kernel(%arg0: i32, %arg1: memref<256x1xi32, #tpu.memory_space<vmem>>, %arg2: memref<80x128xf32, #tpu.memory_space<vmem>>, %arg3: memref<32x128xf32, #tpu.memory_space<vmem>>) attributes {dimension_semantics = [#tpu.dimension_semantics<parallel>], iteration_bounds = array<i64: 1>, scalar_prefetch = 0 : i64, scratch_operands = 0 : i64, tpu.core_type = #tpu.core_type<tc>, window_params = [{transform_indices = @transform_0, window_bounds = array<i64: 256, 1>}, {pipeline_mode = #tpu.pipeline_mode<synchronous>, transform_indices = @transform_1, window_bounds = array<i64: 80, 128>}, {transform_indices = @transform_2, window_bounds = array<i64: 32, 128>}]} {
    %c0 = arith.constant 0 : index
    %c0_0 = arith.constant 0 : index
    %0 = vector.load %arg1[%c0, %c0_0] : memref<256x1xi32, #tpu.memory_space<vmem>>, vector<256x1xi32>
    %1 = tpu.iota {dimensions = array<i32: 1>} : vector<256x128xi32>
    %2 = vector.broadcast %0 : vector<256x1xi32> to vector<256x128xi32>
    %3 = arith.cmpi eq, %1, %2 : vector<256x128xi32>
    %4 = arith.extui %3 : vector<256x128xi1> to vector<256x128xi32>
    %5 = arith.sitofp %4 : vector<256x128xi32> to vector<256x128xf32>
    %c0_1 = arith.constant 0 : index
    %c0_2 = arith.constant 0 : index
    %6 = vector.load %arg2[%c0_1, %c0_2] : memref<80x128xf32, #tpu.memory_space<vmem>>, vector<32x128xf32>
    %cst = arith.constant dense<0.000000e+00> : vector<256x32xf32>
    %7 = tpu.matmul %5, %6, %cst {dimension_numbers = #tpu.dot_dimension_numbers<[1], [1], [0], [0], [0, 0, 1, 0], [], []>} : vector<256x128xf32>, vector<32x128xf32>, vector<256x32xf32> -> vector<256x32xf32>
    %c255_i32 = arith.constant 255 : i32
    %8 = tpu.dynamic_rotate %7 by %c255_i32 dim 0 : vector<256x32xf32>, i32 -> vector<256x32xf32>
    %c254_i32 = arith.constant 254 : i32
    %9 = tpu.dynamic_rotate %7 by %c254_i32 dim 0 : vector<256x32xf32>, i32 -> vector<256x32xf32>
    %c253_i32 = arith.constant 253 : i32
    %10 = tpu.dynamic_rotate %7 by %c253_i32 dim 0 : vector<256x32xf32>, i32 -> vector<256x32xf32>
    %11 = tpu.concatenate %7, %8, %9, %10 in 1 : vector<256x32xf32>, vector<256x32xf32>, vector<256x32xf32>, vector<256x32xf32> -> vector<256x128xf32>
    %12 = arith.truncf %11 : vector<256x128xf32> to vector<256x128xbf16>
    %c32 = arith.constant 32 : index
    %c0_3 = arith.constant 0 : index
    %13 = vector.load %arg2[%c32, %c0_3] : memref<80x128xf32, #tpu.memory_space<vmem>>, vector<16x128xf32>
    %14 = arith.truncf %13 : vector<16x128xf32> to vector<16x128xbf16>
    %cst_4 = arith.constant dense<0.000000e+00> : vector<256x16xf32>
    %15 = tpu.matmul %12, %14, %cst_4 {dimension_numbers = #tpu.dot_dimension_numbers<[1], [1], [0], [0], [0, 0, 1, 0], [], []>} : vector<256x128xbf16>, vector<16x128xbf16>, vector<256x16xf32> -> vector<256x16xf32>
    %c72 = arith.constant 72 : index
    %c0_5 = arith.constant 0 : index
    %16 = vector.load %arg2[%c72, %c0_5] : memref<80x128xf32, #tpu.memory_space<vmem>>, vector<1x16xf32>
    %17 = vector.broadcast %16 : vector<1x16xf32> to vector<256x16xf32>
    %18 = arith.addf %15, %17 : vector<256x16xf32>
    %cst_6 = arith.constant 0.000000e+00 : f32
    %19 = vector.broadcast %cst_6 : f32 to vector<256x16xf32>
    %20 = arith.maximumf %18, %19 : vector<256x16xf32>
    %c64 = arith.constant 64 : index
    %c0_7 = arith.constant 0 : index
    %21 = vector.load %arg2[%c64, %c0_7] : memref<80x128xf32, #tpu.memory_space<vmem>>, vector<8x16xf32>
    %22 = vector.shape_cast %20 : vector<256x16xf32> to vector<32x8x16xf32>
    %23 = vector.shape_cast %21 : vector<8x16xf32> to vector<1x8x16xf32>
    %24 = vector.broadcast %23 : vector<1x8x16xf32> to vector<32x8x16xf32>
    %25 = arith.mulf %22, %24 : vector<32x8x16xf32>
    %cst_8 = arith.constant dense<0xFF800000> : vector<32x16xf32>
    %26 = vector.multi_reduction <maximumf>, %25, %cst_8 [1] : vector<32x8x16xf32> to vector<32x16xf32>
    %c48 = arith.constant 48 : index
    %c0_9 = arith.constant 0 : index
    %27 = vector.load %arg2[%c48, %c0_9] : memref<80x128xf32, #tpu.memory_space<vmem>>, vector<16x128xf32>
    %28 = arith.truncf %27 : vector<16x128xf32> to vector<16x128xbf16>
    %c73 = arith.constant 73 : index
    %c0_10 = arith.constant 0 : index
    %29 = vector.load %arg2[%c73, %c0_10] : memref<80x128xf32, #tpu.memory_space<vmem>>, vector<1x128xf32>
    %30 = arith.truncf %26 : vector<32x16xf32> to vector<32x16xbf16>
    %cst_11 = arith.constant dense<0.000000e+00> : vector<32x128xf32>
    %31 = tpu.matmul %30, %28, %cst_11 {dimension_numbers = #tpu.dot_dimension_numbers<[1], [0], [0], [1], [0, 0, 1, 1], [], []>} : vector<32x16xbf16>, vector<16x128xbf16>, vector<32x128xf32> -> vector<32x128xf32>
    %32 = vector.broadcast %29 : vector<1x128xf32> to vector<32x128xf32>
    %33 = arith.addf %31, %32 : vector<32x128xf32>
    %c0_12 = arith.constant 0 : index
    %c0_13 = arith.constant 0 : index
    %34 = vector.load %arg3[%c0_12, %c0_13] : memref<32x128xf32, #tpu.memory_space<vmem>>, vector<32x128xf32>
    tpu.vector_store %arg3[%c0_12, %c0_13], %33 {strides = array<i32>} : memref<32x128xf32, #tpu.memory_space<vmem>>, vector<32x128xf32>,
    return
  }
  func.func @transform_0(%arg0: i32) -> (i32, i32) {
    %c0_i32 = arith.constant 0 : i32
    %c0_i32_0 = arith.constant 0 : i32
    return %arg0, %c0_i32 : i32, i32
  }
  func.func @transform_1(%arg0: i32) -> (i32, i32) {
    %c0_i32 = arith.constant 0 : i32
    %c0_i32_0 = arith.constant 0 : i32
    %c0_i32_1 = arith.constant 0 : i32
    return %c0_i32, %c0_i32_0 : i32, i32
  }
  func.func @transform_2(%arg0: i32) -> (i32, i32) {
    %c0_i32 = arith.constant 0 : i32
    %c0_i32_0 = arith.constant 0 : i32
    return %arg0, %c0_i32 : i32, i32
  }
}

</mosaic_0001>

<llo_original>
// kernel: tpu_custom_call.1
$region0: #{tpu_custom_call.1}
  #allocation0 [shape = 'u32[]', space=smem, size = 0x4, offset = 0x4, fixed_abs, tag = 'smem constant byte address 0x4 - core index']
  #allocation1 [shape = 'u32[72,128]{1,0:T(1,128)}', space=vmem, size = 0x9000, scoped, tag = 'internal scratch']
  %s0 = inlined_call_operand.vmem [shape: s32[256,1], index: 0, kind: input, shape index: {}]
  %s1 = inlined_call_operand.vmem [shape: f32[80,128], index: 1, kind: input, shape index: {}]
  %s2 = inlined_call_operand.hbm [shape: f32[32,128], index: 2, kind: output, shape index: {}]
  %s3 = sld [smem:[#allocation0]]
  $region18: #{tpu_custom_call.1} parent=0
    _
  %s5 = ssub.s32 1, %s3
  %s6 = scalar_select 0, %s5, %s3
  $region1: #{tpu_custom_call.1} parent=0
    #allocation2 [shape = 'u8[16384]{0}', space=vmem, size = 0x4000, scoped, tag = 'output window, operand 0, single buffered']
    #allocation3 [shape = 's32[1]{0}', space=sflag, size = 0x4, scoped, tag = 'scoped memory for tpu_custom_call.1']
    %7 = vsyncpa [#allocation3], 0
    // Predicated region
    $region2: #{tpu_custom_call.1} parent=1 // pred_check
      _
    $region3: #{tpu_custom_call.1} parent=1 // pred_check_branch
      %9 = sbr.rel (0) target = $region5
    $region4: #{tpu_custom_call.1} parent=1 // pred_region
      _
    $region5: #{tpu_custom_call.1} parent=1 // pred_fallthru
      _
    // Predicated region
    $region6: #{tpu_custom_call.1} parent=1 // pred_check
      _
    $region7: #{tpu_custom_call.1} parent=1 // pred_check_branch
      %11 = sbr.rel (0) target = $region9
    $region8: #{tpu_custom_call.1} parent=1 // pred_region
      _
    $region9: #{tpu_custom_call.1} parent=1 // pred_fallthru
      _
    %v13 = vld [vmem:[%s0] sm:$0xff]
    %v14 = vld [vmem:[%s0 + $0x8] sm:$0xff]
    %v15 = vld [vmem:[%s0 + $0x10] sm:$0xff]
    %v16 = vld [vmem:[%s0 + $0x18] sm:$0xff]
    %v17 = vld [vmem:[%s0 + $0x20] sm:$0xff]
    %v18 = vld [vmem:[%s0 + $0x28] sm:$0xff]
    %v19 = vld [vmem:[%s0 + $0x30] sm:$0xff]
    %v20 = vld [vmem:[%s0 + $0x38] sm:$0xff]
    %v21 = vld [vmem:[%s0 + $0x40] sm:$0xff]
    %v22 = vld [vmem:[%s0 + $0x48] sm:$0xff]
    %v23 = vld [vmem:[%s0 + $0x50] sm:$0xff]
    %v24 = vld [vmem:[%s0 + $0x58] sm:$0xff]
    %v25 = vld [vmem:[%s0 + $0x60] sm:$0xff]
    %v26 = vld [vmem:[%s0 + $0x68] sm:$0xff]
    %v27 = vld [vmem:[%s0 + $0x70] sm:$0xff]
    %v28 = vld [vmem:[%s0 + $0x78] sm:$0xff]
    %v29 = vld [vmem:[%s0 + $0x80] sm:$0xff]
    %v30 = vld [vmem:[%s0 + $0x88] sm:$0xff]
    %v31 = vld [vmem:[%s0 + $0x90] sm:$0xff]
    %v32 = vld [vmem:[%s0 + $0x98] sm:$0xff]
    %v33 = vld [vmem:[%s0 + $0xa0] sm:$0xff]
    %v34 = vld [vmem:[%s0 + $0xa8] sm:$0xff]
    %v35 = vld [vmem:[%s0 + $0xb0] sm:$0xff]
    %v36 = vld [vmem:[%s0 + $0xb8] sm:$0xff]
    %v37 = vld [vmem:[%s0 + $0xc0] sm:$0xff]
    %v38 = vld [vmem:[%s0 + $0xc8] sm:$0xff]
    %v39 = vld [vmem:[%s0 + $0xd0] sm:$0xff]
    %v40 = vld [vmem:[%s0 + $0xd8] sm:$0xff]
    %v41 = vld [vmem:[%s0 + $0xe0] sm:$0xff]
    %v42 = vld [vmem:[%s0 + $0xe8] sm:$0xff]
    %v43 = vld [vmem:[%s0 + $0xf0] sm:$0xff]
    %v44 = vld [vmem:[%s0 + $0xf8] sm:$0xff]
    %v45 = vlaneseq
    %v46 = vand.u32 %v45, 127
    %47 = vset.pattern.permute.xlu0 0
    %48 = vperm.xlu0 %47, %v13
    %v49 = vpop.permute.xlu0 %48
    %50 = vset.pattern.permute.xlu0 0
    %51 = vperm.xlu0 %50, %v14
    %v52 = vpop.permute.xlu0 %51
    %53 = vset.pattern.permute.xlu0 0
    %54 = vperm.xlu0 %53, %v15
    %v55 = vpop.permute.xlu0 %54
    %56 = vset.pattern.permute.xlu0 0
    %57 = vperm.xlu0 %56, %v16
    %v58 = vpop.permute.xlu0 %57
    %59 = vset.pattern.permute.xlu0 0
    %60 = vperm.xlu0 %59, %v17
    %v61 = vpop.permute.xlu0 %60
    %62 = vset.pattern.permute.xlu0 0
    %63 = vperm.xlu0 %62, %v18
    %v64 = vpop.permute.xlu0 %63
    %65 = vset.pattern.permute.xlu0 0
    %66 = vperm.xlu0 %65, %v19
    %v67 = vpop.permute.xlu0 %66
    %68 = vset.pattern.permute.xlu0 0
    %69 = vperm.xlu0 %68, %v20
    %v70 = vpop.permute.xlu0 %69
    %71 = vset.pattern.permute.xlu0 0
    %72 = vperm.xlu0 %71, %v21
    %v73 = vpop.permute.xlu0 %72
    %74 = vset.pattern.permute.xlu0 0
    %75 = vperm.xlu0 %74, %v22
    %v76 = vpop.permute.xlu0 %75
    %77 = vset.pattern.permute.xlu0 0
    %78 = vperm.xlu0 %77, %v23
    %v79 = vpop.permute.xlu0 %78
    %80 = vset.pattern.permute.xlu0 0
    %81 = vperm.xlu0 %80, %v24
    %v82 = vpop.permute.xlu0 %81
    %83 = vset.pattern.permute.xlu0 0
    %84 = vperm.xlu0 %83, %v25
    %v85 = vpop.permute.xlu0 %84
    %86 = vset.pattern.permute.xlu0 0
    %87 = vperm.xlu0 %86, %v26
    %v88 = vpop.permute.xlu0 %87
    %89 = vset.pattern.permute.xlu0 0
    %90 = vperm.xlu0 %89, %v27
    %v91 = vpop.permute.xlu0 %90
    %92 = vset.pattern.permute.xlu0 0
    %93 = vperm.xlu0 %92, %v28
    %v94 = vpop.permute.xlu0 %93
    %95 = vset.pattern.permute.xlu0 0
    %96 = vperm.xlu0 %95, %v29
    %v97 = vpop.permute.xlu0 %96
    %98 = vset.pattern.permute.xlu0 0
    %99 = vperm.xlu0 %98, %v30
    %v100 = vpop.permute.xlu0 %99
    %101 = vset.pattern.permute.xlu0 0
    %102 = vperm.xlu0 %101, %v31
    %v103 = vpop.permute.xlu0 %102
    %104 = vset.pattern.permute.xlu0 0
    %105 = vperm.xlu0 %104, %v32
    %v106 = vpop.permute.xlu0 %105
    %107 = vset.pattern.permute.xlu0 0
    %108 = vperm.xlu0 %107, %v33
    %v109 = vpop.permute.xlu0 %108
    %110 = vset.pattern.permute.xlu0 0
    %111 = vperm.xlu0 %110, %v34
    %v112 = vpop.permute.xlu0 %111
    %113 = vset.pattern.permute.xlu0 0
    %114 = vperm.xlu0 %113, %v35
    %v115 = vpop.permute.xlu0 %114
    %116 = vset.pattern.permute.xlu0 0
    %117 = vperm.xlu0 %116, %v36
    %v118 = vpop.permute.xlu0 %117
    %119 = vset.pattern.permute.xlu0 0
    %120 = vperm.xlu0 %119, %v37
    %v121 = vpop.permute.xlu0 %120
    %122 = vset.pattern.permute.xlu0 0
    %123 = vperm.xlu0 %122, %v38
    %v124 = vpop.permute.xlu0 %123
    %125 = vset.pattern.permute.xlu0 0
    %126 = vperm.xlu0 %125, %v39
    %v127 = vpop.permute.xlu0 %126
    %128 = vset.pattern.permute.xlu0 0
    %129 = vperm.xlu0 %128, %v40
    %v130 = vpop.permute.xlu0 %129
    %131 = vset.pattern.permute.xlu0 0
    %132 = vperm.xlu0 %131, %v41
    %v133 = vpop.permute.xlu0 %132
    %134 = vset.pattern.permute.xlu0 0
    %135 = vperm.xlu0 %134, %v42
    %v136 = vpop.permute.xlu0 %135
    %137 = vset.pattern.permute.xlu0 0
    %138 = vperm.xlu0 %137, %v43
    %v139 = vpop.permute.xlu0 %138
    %140 = vset.pattern.permute.xlu0 0
    %141 = vperm.xlu0 %140, %v44
    %v142 = vpop.permute.xlu0 %141
    %vm143 = vcmp.eq.s32.totalorder %v46, %v49
    %vm144 = vcmp.eq.s32.totalorder %v46, %v52
    %vm145 = vcmp.eq.s32.totalorder %v46, %v55
    %vm146 = vcmp.eq.s32.totalorder %v46, %v58
    %vm147 = vcmp.eq.s32.totalorder %v46, %v61
    %vm148 = vcmp.eq.s32.totalorder %v46, %v64
    %vm149 = vcmp.eq.s32.totalorder %v46, %v67
    %vm150 = vcmp.eq.s32.totalorder %v46, %v70
    %vm151 = vcmp.eq.s32.totalorder %v46, %v73
    %vm152 = vcmp.eq.s32.totalorder %v46, %v76
    %vm153 = vcmp.eq.s32.totalorder %v46, %v79
    %vm154 = vcmp.eq.s32.totalorder %v46, %v82
    %vm155 = vcmp.eq.s32.totalorder %v46, %v85
    %vm156 = vcmp.eq.s32.totalorder %v46, %v88
    %vm157 = vcmp.eq.s32.totalorder %v46, %v91
    %vm158 = vcmp.eq.s32.totalorder %v46, %v94
    %vm159 = vcmp.eq.s32.totalorder %v46, %v97
    %vm160 = vcmp.eq.s32.totalorder %v46, %v100
    %vm161 = vcmp.eq.s32.totalorder %v46, %v103
    %vm162 = vcmp.eq.s32.totalorder %v46, %v106
    %vm163 = vcmp.eq.s32.totalorder %v46, %v109
    %vm164 = vcmp.eq.s32.totalorder %v46, %v112
    %vm165 = vcmp.eq.s32.totalorder %v46, %v115
    %vm166 = vcmp.eq.s32.totalorder %v46, %v118
    %vm167 = vcmp.eq.s32.totalorder %v46, %v121
    %vm168 = vcmp.eq.s32.totalorder %v46, %v124
    %vm169 = vcmp.eq.s32.totalorder %v46, %v127
    %vm170 = vcmp.eq.s32.totalorder %v46, %v130
    %vm171 = vcmp.eq.s32.totalorder %v46, %v133
    %vm172 = vcmp.eq.s32.totalorder %v46, %v136
    %vm173 = vcmp.eq.s32.totalorder %v46, %v139
    %vm174 = vcmp.eq.s32.totalorder %v46, %v142
    %v175 = vsel %vm143, 1, 0
    %v176 = vsel %vm144, 1, 0
    %v177 = vsel %vm145, 1, 0
    %v178 = vsel %vm146, 1, 0
    %v179 = vsel %vm147, 1, 0
    %v180 = vsel %vm148, 1, 0
    %v181 = vsel %vm149, 1, 0
    %v182 = vsel %vm150, 1, 0
    %v183 = vsel %vm151, 1, 0
    %v184 = vsel %vm152, 1, 0
    %v185 = vsel %vm153, 1, 0
    %v186 = vsel %vm154, 1, 0
    %v187 = vsel %vm155, 1, 0
    %v188 = vsel %vm156, 1, 0
    %v189 = vsel %vm157, 1, 0
    %v190 = vsel %vm158, 1, 0
    %v191 = vsel %vm159, 1, 0
    %v192 = vsel %vm160, 1, 0
    %v193 = vsel %vm161, 1, 0
    %v194 = vsel %vm162, 1, 0
    %v195 = vsel %vm163, 1, 0
    %v196 = vsel %vm164, 1, 0
    %v197 = vsel %vm165, 1, 0
    %v198 = vsel %vm166, 1, 0
    %v199 = vsel %vm167, 1, 0
    %v200 = vsel %vm168, 1, 0
    %v201 = vsel %vm169, 1, 0
    %v202 = vsel %vm170, 1, 0
    %v203 = vsel %vm171, 1, 0
    %v204 = vsel %vm172, 1, 0
    %v205 = vsel %vm173, 1, 0
    %v206 = vsel %vm174, 1, 0
    %v207 = vcvt.s32.f32 %v175
    %v208 = vcvt.s32.f32 %v176
    %v209 = vcvt.s32.f32 %v177
    %v210 = vcvt.s32.f32 %v178
    %v211 = vcvt.s32.f32 %v179
    %v212 = vcvt.s32.f32 %v180
    %v213 = vcvt.s32.f32 %v181
    %v214 = vcvt.s32.f32 %v182
    %v215 = vcvt.s32.f32 %v183
    %v216 = vcvt.s32.f32 %v184
    %v217 = vcvt.s32.f32 %v185
    %v218 = vcvt.s32.f32 %v186
    %v219 = vcvt.s32.f32 %v187
    %v220 = vcvt.s32.f32 %v188
    %v221 = vcvt.s32.f32 %v189
    %v222 = vcvt.s32.f32 %v190
    %v223 = vcvt.s32.f32 %v191
    %v224 = vcvt.s32.f32 %v192
    %v225 = vcvt.s32.f32 %v193
    %v226 = vcvt.s32.f32 %v194
    %v227 = vcvt.s32.f32 %v195
    %v228 = vcvt.s32.f32 %v196
    %v229 = vcvt.s32.f32 %v197
    %v230 = vcvt.s32.f32 %v198
    %v231 = vcvt.s32.f32 %v199
    %v232 = vcvt.s32.f32 %v200
    %v233 = vcvt.s32.f32 %v201
    %v234 = vcvt.s32.f32 %v202
    %v235 = vcvt.s32.f32 %v203
    %v236 = vcvt.s32.f32 %v204
    %v237 = vcvt.s32.f32 %v205
    %v238 = vcvt.s32.f32 %v206
    %v239 = vld [vmem:[%s1] sm:$0xff]
    %v240 = vld [vmem:[%s1 + $0x8] sm:$0xff]
    %v241 = vld [vmem:[%s1 + $0x10] sm:$0xff]
    %v242 = vld [vmem:[%s1 + $0x18] sm:$0xff]
    %243 = vmatpush.xpose.msra.mxu0 0.0
    %244 = vmatpush.xpose.msra.mxu0 0.0
    %245 = vmatpush.xpose.msra.mxu0 0.0
    %246 = vmatpush.xpose.msra.mxu0 0.0
    %247 = vmatpush.xpose.msra.mxu0 0.0
    %248 = vmatpush.xpose.msra.mxu0 0.0
    %249 = vmatpush.xpose.msra.mxu0 0.0
    %250 = vmatpush.xpose.msra.mxu0 0.0
    %251 = vmatpush.xpose.msra.mxu0 0.0
    %252 = vmatpush.xpose.msra.mxu0 0.0
    %253 = vmatpush.xpose.msra.mxu0 0.0
    %254 = vmatpush.xpose.msra.mxu0 0.0
    %255 = vmatpush.xpose.msra.mxu0 %v242
    %256 = vmatpush.xpose.msra.mxu0 %v241
    %257 = vmatpush.xpose.msra.mxu0 %v240
    %258 = vmatpush.xpose.msra.mxu0 %v239
    %259 = vmatmul.f32.gmra.mxu0 %v207
    %v260 = vpop.f32.mrf.mxu0
    %v261 = vadd.f32 0.0, %v260
    %262 = vmatmul.f32.gmra.mxu0 %v208
    %v263 = vpop.f32.mrf.mxu0
    %v264 = vadd.f32 0.0, %v263
    %265 = vmatmul.f32.gmra.mxu0 %v209
    %v266 = vpop.f32.mrf.mxu0
    %v267 = vadd.f32 0.0, %v266
    %268 = vmatmul.f32.gmra.mxu0 %v210
    %v269 = vpop.f32.mrf.mxu0
    %v270 = vadd.f32 0.0, %v269
    %271 = vmatmul.f32.gmra.mxu0 %v211
    %v272 = vpop.f32.mrf.mxu0
    %v273 = vadd.f32 0.0, %v272
    %274 = vmatmul.f32.gmra.mxu0 %v212
    %v275 = vpop.f32.mrf.mxu0
    %v276 = vadd.f32 0.0, %v275
    %277 = vmatmul.f32.gmra.mxu0 %v213
    %v278 = vpop.f32.mrf.mxu0
    %v279 = vadd.f32 0.0, %v278
    %280 = vmatmul.f32.gmra.mxu0 %v214
    %v281 = vpop.f32.mrf.mxu0
    %v282 = vadd.f32 0.0, %v281
    %283 = vmatmul.f32.gmra.mxu0 %v215
    %v284 = vpop.f32.mrf.mxu0
    %v285 = vadd.f32 0.0, %v284
    %286 = vmatmul.f32.gmra.mxu0 %v216
    %v287 = vpop.f32.mrf.mxu0
    %v288 = vadd.f32 0.0, %v287
    %289 = vmatmul.f32.gmra.mxu0 %v217
    %v290 = vpop.f32.mrf.mxu0
    %v291 = vadd.f32 0.0, %v290
    %292 = vmatmul.f32.gmra.mxu0 %v218
    %v293 = vpop.f32.mrf.mxu0
    %v294 = vadd.f32 0.0, %v293
    %295 = vmatmul.f32.gmra.mxu0 %v219
    %v296 = vpop.f32.mrf.mxu0
    %v297 = vadd.f32 0.0, %v296
    %298 = vmatmul.f32.gmra.mxu0 %v220
    %v299 = vpop.f32.mrf.mxu0
    %v300 = vadd.f32 0.0, %v299
    %301 = vmatmul.f32.gmra.mxu0 %v221
    %v302 = vpop.f32.mrf.mxu0
    %v303 = vadd.f32 0.0, %v302
    %304 = vmatmul.f32.gmra.mxu0 %v222
    %v305 = vpop.f32.mrf.mxu0
    %v306 = vadd.f32 0.0, %v305
    %307 = vmatmul.f32.gmra.mxu0 %v223
    %v308 = vpop.f32.mrf.mxu0
    %v309 = vadd.f32 0.0, %v308
    %310 = vmatmul.f32.gmra.mxu0 %v224
    %v311 = vpop.f32.mrf.mxu0
    %v312 = vadd.f32 0.0, %v311
    %313 = vmatmul.f32.gmra.mxu0 %v225
    %v314 = vpop.f32.mrf.mxu0
    %v315 = vadd.f32 0.0, %v314
    %316 = vmatmul.f32.gmra.mxu0 %v226
    %v317 = vpop.f32.mrf.mxu0
    %v318 = vadd.f32 0.0, %v317
    %319 = vmatmul.f32.gmra.mxu0 %v227
    %v320 = vpop.f32.mrf.mxu0
    %v321 = vadd.f32 0.0, %v320
    %322 = vmatmul.f32.gmra.mxu0 %v228
    %v323 = vpop.f32.mrf.mxu0
    %v324 = vadd.f32 0.0, %v323
    %325 = vmatmul.f32.gmra.mxu0 %v229
    %v326 = vpop.f32.mrf.mxu0
    %v327 = vadd.f32 0.0, %v326
    %328 = vmatmul.f32.gmra.mxu0 %v230
    %v329 = vpop.f32.mrf.mxu0
    %v330 = vadd.f32 0.0, %v329
    %331 = vmatmul.f32.gmra.mxu0 %v231
    %v332 = vpop.f32.mrf.mxu0
    %v333 = vadd.f32 0.0, %v332
    %334 = vmatmul.f32.gmra.mxu0 %v232
    %v335 = vpop.f32.mrf.mxu0
    %v336 = vadd.f32 0.0, %v335
    %337 = vmatmul.f32.gmra.mxu0 %v233
    %v338 = vpop.f32.mrf.mxu0
    %v339 = vadd.f32 0.0, %v338
    %340 = vmatmul.f32.gmra.mxu0 %v234
    %v341 = vpop.f32.mrf.mxu0
    %v342 = vadd.f32 0.0, %v341
    %343 = vmatmul.f32.gmra.mxu0 %v235
    %v344 = vpop.f32.mrf.mxu0
    %v345 = vadd.f32 0.0, %v344
    %346 = vmatmul.f32.gmra.mxu0 %v236
    %v347 = vpop.f32.mrf.mxu0
    %v348 = vadd.f32 0.0, %v347
    %349 = vmatmul.f32.gmra.mxu0 %v237
    %v350 = vpop.f32.mrf.mxu0
    %v351 = vadd.f32 0.0, %v350
    %352 = vmatmul.f32.gmra.mxu0 %v238
    %v353 = vpop.f32.mrf.mxu0
    %v354 = vadd.f32 0.0, %v353
    %355 = vdwg.mxu0
    %v356 = vrot.slane %v261, 1
    %v357 = vrot.slane %v264, 1
    %v358 = vrot.slane %v267, 1
    %v359 = vrot.slane %v270, 1
    %v360 = vrot.slane %v273, 1
    %v361 = vrot.slane %v276, 1
    %v362 = vrot.slane %v279, 1
    %v363 = vrot.slane %v282, 1
    %v364 = vrot.slane %v285, 1
    %v365 = vrot.slane %v288, 1
    %v366 = vrot.slane %v291, 1
    %v367 = vrot.slane %v294, 1
    %v368 = vrot.slane %v297, 1
    %v369 = vrot.slane %v300, 1
    %v370 = vrot.slane %v303, 1
    %v371 = vrot.slane %v306, 1
    %v372 = vrot.slane %v309, 1
    %v373 = vrot.slane %v312, 1
    %v374 = vrot.slane %v315, 1
    %v375 = vrot.slane %v318, 1
    %v376 = vrot.slane %v321, 1
    %v377 = vrot.slane %v324, 1
    %v378 = vrot.slane %v327, 1
    %v379 = vrot.slane %v330, 1
    %v380 = vrot.slane %v333, 1
    %v381 = vrot.slane %v336, 1
    %v382 = vrot.slane %v339, 1
    %v383 = vrot.slane %v342, 1
    %v384 = vrot.slane %v345, 1
    %v385 = vrot.slane %v348, 1
    %v386 = vrot.slane %v351, 1
    %v387 = vrot.slane %v354, 1
    %v388 = vlaneseq
    %v389 = vshrl.u32 %v388, 7
    %vm390 = vcmp.lt.s32.totalorder %v389, 7
    %v391 = vsel %vm390, %v386, %v387
    %v392 = vsel %vm390, %v385, %v386
    %v393 = vsel %vm390, %v384, %v385
    %v394 = vsel %vm390, %v383, %v384
    %v395 = vsel %vm390, %v382, %v383
    %v396 = vsel %vm390, %v381, %v382
    %v397 = vsel %vm390, %v380, %v381
    %v398 = vsel %vm390, %v379, %v380
    %v399 = vsel %vm390, %v378, %v379
    %v400 = vsel %vm390, %v377, %v378
    %v401 = vsel %vm390, %v376, %v377
    %v402 = vsel %vm390, %v375, %v376
    %v403 = vsel %vm390, %v374, %v375
    %v404 = vsel %vm390, %v373, %v374
    %v405 = vsel %vm390, %v372, %v373
    %v406 = vsel %vm390, %v371, %v372
    %v407 = vsel %vm390, %v370, %v371
    %v408 = vsel %vm390, %v369, %v370
    %v409 = vsel %vm390, %v368, %v369
    %v410 = vsel %vm390, %v367, %v368
    %v411 = vsel %vm390, %v366, %v367
    %v412 = vsel %vm390, %v365, %v366
    %v413 = vsel %vm390, %v364, %v365
    %v414 = vsel %vm390, %v363, %v364
    %v415 = vsel %vm390, %v362, %v363
    %v416 = vsel %vm390, %v361, %v362
    %v417 = vsel %vm390, %v360, %v361
    %v418 = vsel %vm390, %v359, %v360
    %v419 = vsel %vm390, %v358, %v359
    %v420 = vsel %vm390, %v357, %v358
    %v421 = vsel %vm390, %v356, %v357
    %v422 = vsel %vm390, %v387, %v356
    %v423 = vrot.slane %v261, 2
    %v424 = vrot.slane %v264, 2
    %v425 = vrot.slane %v267, 2
    %v426 = vrot.slane %v270, 2
    %v427 = vrot.slane %v273, 2
    %v428 = vrot.slane %v276, 2
    %v429 = vrot.slane %v279, 2
    %v430 = vrot.slane %v282, 2
    %v431 = vrot.slane %v285, 2
    %v432 = vrot.slane %v288, 2
    %v433 = vrot.slane %v291, 2
    %v434 = vrot.slane %v294, 2
    %v435 = vrot.slane %v297, 2
    %v436 = vrot.slane %v300, 2
    %v437 = vrot.slane %v303, 2
    %v438 = vrot.slane %v306, 2
    %v439 = vrot.slane %v309, 2
    %v440 = vrot.slane %v312, 2
    %v441 = vrot.slane %v315, 2
    %v442 = vrot.slane %v318, 2
    %v443 = vrot.slane %v321, 2
    %v444 = vrot.slane %v324, 2
    %v445 = vrot.slane %v327, 2
    %v446 = vrot.slane %v330, 2
    %v447 = vrot.slane %v333, 2
    %v448 = vrot.slane %v336, 2
    %v449 = vrot.slane %v339, 2
    %v450 = vrot.slane %v342, 2
    %v451 = vrot.slane %v345, 2
    %v452 = vrot.slane %v348, 2
    %v453 = vrot.slane %v351, 2
    %v454 = vrot.slane %v354, 2
    %vm455 = vcmp.lt.s32.totalorder %v389, 6
    %v456 = vsel %vm455, %v453, %v454
    %v457 = vsel %vm455, %v452, %v453
    %v458 = vsel %vm455, %v451, %v452
    %v459 = vsel %vm455, %v450, %v451
    %v460 = vsel %vm455, %v449, %v450
    %v461 = vsel %vm455, %v448, %v449
    %v462 = vsel %vm455, %v447, %v448
    %v463 = vsel %vm455, %v446, %v447
    %v464 = vsel %vm455, %v445, %v446
    %v465 = vsel %vm455, %v444, %v445
    %v466 = vsel %vm455, %v443, %v444
    %v467 = vsel %vm455, %v442, %v443
    %v468 = vsel %vm455, %v441, %v442
    %v469 = vsel %vm455, %v440, %v441
    %v470 = vsel %vm455, %v439, %v440
    %v471 = vsel %vm455, %v438, %v439
    %v472 = vsel %vm455, %v437, %v438
    %v473 = vsel %vm455, %v436, %v437
    %v474 = vsel %vm455, %v435, %v436
    %v475 = vsel %vm455, %v434, %v435
    %v476 = vsel %vm455, %v433, %v434
    %v477 = vsel %vm455, %v432, %v433
    %v478 = vsel %vm455, %v431, %v432
    %v479 = vsel %vm455, %v430, %v431
    %v480 = vsel %vm455, %v429, %v430
    %v481 = vsel %vm455, %v428, %v429
    %v482 = vsel %vm455, %v427, %v428
    %v483 = vsel %vm455, %v426, %v427
    %v484 = vsel %vm455, %v425, %v426
    %v485 = vsel %vm455, %v424, %v425
    %v486 = vsel %vm455, %v423, %v424
    %v487 = vsel %vm455, %v454, %v423
    %v488 = vrot.slane %v261, 3
    %v489 = vrot.slane %v264, 3
    %v490 = vrot.slane %v267, 3
    %v491 = vrot.slane %v270, 3
    %v492 = vrot.slane %v273, 3
    %v493 = vrot.slane %v276, 3
    %v494 = vrot.slane %v279, 3
    %v495 = vrot.slane %v282, 3
    %v496 = vrot.slane %v285, 3
    %v497 = vrot.slane %v288, 3
    %v498 = vrot.slane %v291, 3
    %v499 = vrot.slane %v294, 3
    %v500 = vrot.slane %v297, 3
    %v501 = vrot.slane %v300, 3
    %v502 = vrot.slane %v303, 3
    %v503 = vrot.slane %v306, 3
    %v504 = vrot.slane %v309, 3
    %v505 = vrot.slane %v312, 3
    %v506 = vrot.slane %v315, 3
    %v507 = vrot.slane %v318, 3
    %v508 = vrot.slane %v321, 3
    %v509 = vrot.slane %v324, 3
    %v510 = vrot.slane %v327, 3
    %v511 = vrot.slane %v330, 3
    %v512 = vrot.slane %v333, 3
    %v513 = vrot.slane %v336, 3
    %v514 = vrot.slane %v339, 3
    %v515 = vrot.slane %v342, 3
    %v516 = vrot.slane %v345, 3
    %v517 = vrot.slane %v348, 3
    %v518 = vrot.slane %v351, 3
    %v519 = vrot.slane %v354, 3
    %vm520 = vcmp.lt.s32.totalorder %v389, 5
    %v521 = vsel %vm520, %v518, %v519
    %v522 = vsel %vm520, %v517, %v518
    %v523 = vsel %vm520, %v516, %v517
    %v524 = vsel %vm520, %v515, %v516
    %v525 = vsel %vm520, %v514, %v515
    %v526 = vsel %vm520, %v513, %v514
    %v527 = vsel %vm520, %v512, %v513
    %v528 = vsel %vm520, %v511, %v512
    %v529 = vsel %vm520, %v510, %v511
    %v530 = vsel %vm520, %v509, %v510
    %v531 = vsel %vm520, %v508, %v509
    %v532 = vsel %vm520, %v507, %v508
    %v533 = vsel %vm520, %v506, %v507
    %v534 = vsel %vm520, %v505, %v506
    %v535 = vsel %vm520, %v504, %v505
    %v536 = vsel %vm520, %v503, %v504
    %v537 = vsel %vm520, %v502, %v503
    %v538 = vsel %vm520, %v501, %v502
    %v539 = vsel %vm520, %v500, %v501
    %v540 = vsel %vm520, %v499, %v500
    %v541 = vsel %vm520, %v498, %v499
    %v542 = vsel %vm520, %v497, %v498
    %v543 = vsel %vm520, %v496, %v497
    %v544 = vsel %vm520, %v495, %v496
    %v545 = vsel %vm520, %v494, %v495
    %v546 = vsel %vm520, %v493, %v494
    %v547 = vsel %vm520, %v492, %v493
    %v548 = vsel %vm520, %v491, %v492
    %v549 = vsel %vm520, %v490, %v491
    %v550 = vsel %vm520, %v489, %v490
    %v551 = vsel %vm520, %v488, %v489
    %v552 = vsel %vm520, %v519, %v488
    %585 = vrot.lane.b32.xlu0 %v421, 32
    %v586 = vpop.permute.xlu0 %585
    %587 = vrot.lane.b32.xlu0 %v420, 32
    %v588 = vpop.permute.xlu0 %587
    %589 = vrot.lane.b32.xlu0 %v419, 32
    %v590 = vpop.permute.xlu0 %589
    %591 = vrot.lane.b32.xlu0 %v418, 32
    %v592 = vpop.permute.xlu0 %591
    %593 = vrot.lane.b32.xlu0 %v417, 32
    %v594 = vpop.permute.xlu0 %593
    %595 = vrot.lane.b32.xlu0 %v416, 32
    %v596 = vpop.permute.xlu0 %595
    %597 = vrot.lane.b32.xlu0 %v415, 32
    %v598 = vpop.permute.xlu0 %597
    %599 = vrot.lane.b32.xlu0 %v414, 32
    %v600 = vpop.permute.xlu0 %599
    %601 = vrot.lane.b32.xlu0 %v413, 32
    %v602 = vpop.permute.xlu0 %601
    %603 = vrot.lane.b32.xlu0 %v412, 32
    %v604 = vpop.permute.xlu0 %603
    %605 = vrot.lane.b32.xlu0 %v411, 32
    %v606 = vpop.permute.xlu0 %605
    %607 = vrot.lane.b32.xlu0 %v410, 32
    %v608 = vpop.permute.xlu0 %607
    %609 = vrot.lane.b32.xlu0 %v409, 32
    %v610 = vpop.permute.xlu0 %609
    %611 = vrot.lane.b32.xlu0 %v408, 32
    %v612 = vpop.permute.xlu0 %611
    %613 = vrot.lane.b32.xlu0 %v407, 32
    %v614 = vpop.permute.xlu0 %613
    %615 = vrot.lane.b32.xlu0 %v406, 32
    %v616 = vpop.permute.xlu0 %615
    %617 = vrot.lane.b32.xlu0 %v405, 32
    %v618 = vpop.permute.xlu0 %617
    %619 = vrot.lane.b32.xlu0 %v404, 32
    %v620 = vpop.permute.xlu0 %619
    %621 = vrot.lane.b32.xlu0 %v403, 32
    %v622 = vpop.permute.xlu0 %621
    %623 = vrot.lane.b32.xlu0 %v402, 32
    %v624 = vpop.permute.xlu0 %623
    %625 = vrot.lane.b32.xlu0 %v401, 32
    %v626 = vpop.permute.xlu0 %625
    %627 = vrot.lane.b32.xlu0 %v400, 32
    %v628 = vpop.permute.xlu0 %627
    %629 = vrot.lane.b32.xlu0 %v399, 32
    %v630 = vpop.permute.xlu0 %629
    %631 = vrot.lane.b32.xlu0 %v398, 32
    %v632 = vpop.permute.xlu0 %631
    %633 = vrot.lane.b32.xlu0 %v397, 32
    %v634 = vpop.permute.xlu0 %633
    %635 = vrot.lane.b32.xlu0 %v396, 32
    %v636 = vpop.permute.xlu0 %635
    %637 = vrot.lane.b32.xlu0 %v395, 32
    %v638 = vpop.permute.xlu0 %637
    %639 = vrot.lane.b32.xlu0 %v394, 32
    %v640 = vpop.permute.xlu0 %639
    %641 = vrot.lane.b32.xlu0 %v393, 32
    %v642 = vpop.permute.xlu0 %641
    %643 = vrot.lane.b32.xlu0 %v392, 32
    %v644 = vpop.permute.xlu0 %643
    %645 = vrot.lane.b32.xlu0 %v391, 32
    %v646 = vpop.permute.xlu0 %645
    %647 = vrot.lane.b32.xlu0 %v422, 32
    %v648 = vpop.permute.xlu0 %647
    %713 = vrot.lane.b32.xlu0 %v486, 64
    %v714 = vpop.permute.xlu0 %713
    %715 = vrot.lane.b32.xlu0 %v485, 64
    %v716 = vpop.permute.xlu0 %715
    %717 = vrot.lane.b32.xlu0 %v484, 64
    %v718 = vpop.permute.xlu0 %717
    %719 = vrot.lane.b32.xlu0 %v483, 64
    %v720 = vpop.permute.xlu0 %719
    %721 = vrot.lane.b32.xlu0 %v482, 64
    %v722 = vpop.permute.xlu0 %721
    %723 = vrot.lane.b32.xlu0 %v481, 64
    %v724 = vpop.permute.xlu0 %723
    %725 = vrot.lane.b32.xlu0 %v480, 64
    %v726 = vpop.permute.xlu0 %725
    %727 = vrot.lane.b32.xlu0 %v479, 64
    %v728 = vpop.permute.xlu0 %727
    %729 = vrot.lane.b32.xlu0 %v478, 64
    %v730 = vpop.permute.xlu0 %729
    %731 = vrot.lane.b32.xlu0 %v477, 64
    %v732 = vpop.permute.xlu0 %731
    %733 = vrot.lane.b32.xlu0 %v476, 64
    %v734 = vpop.permute.xlu0 %733
    %735 = vrot.lane.b32.xlu0 %v475, 64
    %v736 = vpop.permute.xlu0 %735
    %737 = vrot.lane.b32.xlu0 %v474, 64
    %v738 = vpop.permute.xlu0 %737
    %739 = vrot.lane.b32.xlu0 %v473, 64
    %v740 = vpop.permute.xlu0 %739
    %741 = vrot.lane.b32.xlu0 %v472, 64
    %v742 = vpop.permute.xlu0 %741
    %743 = vrot.lane.b32.xlu0 %v471, 64
    %v744 = vpop.permute.xlu0 %743
    %745 = vrot.lane.b32.xlu0 %v470, 64
    %v746 = vpop.permute.xlu0 %745
    %747 = vrot.lane.b32.xlu0 %v469, 64
    %v748 = vpop.permute.xlu0 %747
    %749 = vrot.lane.b32.xlu0 %v468, 64
    %v750 = vpop.permute.xlu0 %749
    %751 = vrot.lane.b32.xlu0 %v467, 64
    %v752 = vpop.permute.xlu0 %751
    %753 = vrot.lane.b32.xlu0 %v466, 64
    %v754 = vpop.permute.xlu0 %753
    %755 = vrot.lane.b32.xlu0 %v465, 64
    %v756 = vpop.permute.xlu0 %755
    %757 = vrot.lane.b32.xlu0 %v464, 64
    %v758 = vpop.permute.xlu0 %757
    %759 = vrot.lane.b32.xlu0 %v463, 64
    %v760 = vpop.permute.xlu0 %759
    %761 = vrot.lane.b32.xlu0 %v462, 64
    %v762 = vpop.permute.xlu0 %761
    %763 = vrot.lane.b32.xlu0 %v461, 64
    %v764 = vpop.permute.xlu0 %763
    %765 = vrot.lane.b32.xlu0 %v460, 64
    %v766 = vpop.permute.xlu0 %765
    %767 = vrot.lane.b32.xlu0 %v459, 64
    %v768 = vpop.permute.xlu0 %767
    %769 = vrot.lane.b32.xlu0 %v458, 64
    %v770 = vpop.permute.xlu0 %769
    %771 = vrot.lane.b32.xlu0 %v457, 64
    %v772 = vpop.permute.xlu0 %771
    %773 = vrot.lane.b32.xlu0 %v456, 64
    %v774 = vpop.permute.xlu0 %773
    %775 = vrot.lane.b32.xlu0 %v487, 64
    %v776 = vpop.permute.xlu0 %775
    %841 = vrot.lane.b32.xlu0 %v551, 96
    %v842 = vpop.permute.xlu0 %841
    %843 = vrot.lane.b32.xlu0 %v550, 96
    %v844 = vpop.permute.xlu0 %843
    %845 = vrot.lane.b32.xlu0 %v549, 96
    %v846 = vpop.permute.xlu0 %845
    %847 = vrot.lane.b32.xlu0 %v548, 96
    %v848 = vpop.permute.xlu0 %847
    %849 = vrot.lane.b32.xlu0 %v547, 96
    %v850 = vpop.permute.xlu0 %849
    %851 = vrot.lane.b32.xlu0 %v546, 96
    %v852 = vpop.permute.xlu0 %851
    %853 = vrot.lane.b32.xlu0 %v545, 96
    %v854 = vpop.permute.xlu0 %853
    %855 = vrot.lane.b32.xlu0 %v544, 96
    %v856 = vpop.permute.xlu0 %855
    %857 = vrot.lane.b32.xlu0 %v543, 96
    %v858 = vpop.permute.xlu0 %857
    %859 = vrot.lane.b32.xlu0 %v542, 96
    %v860 = vpop.permute.xlu0 %859
    %861 = vrot.lane.b32.xlu0 %v541, 96
    %v862 = vpop.permute.xlu0 %861
    %863 = vrot.lane.b32.xlu0 %v540, 96
    %v864 = vpop.permute.xlu0 %863
    %865 = vrot.lane.b32.xlu0 %v539, 96
    %v866 = vpop.permute.xlu0 %865
    %867 = vrot.lane.b32.xlu0 %v538, 96
    %v868 = vpop.permute.xlu0 %867
    %869 = vrot.lane.b32.xlu0 %v537, 96
    %v870 = vpop.permute.xlu0 %869
    %871 = vrot.lane.b32.xlu0 %v536, 96
    %v872 = vpop.permute.xlu0 %871
    %873 = vrot.lane.b32.xlu0 %v535, 96
    %v874 = vpop.permute.xlu0 %873
    %875 = vrot.lane.b32.xlu0 %v534, 96
    %v876 = vpop.permute.xlu0 %875
    %877 = vrot.lane.b32.xlu0 %v533, 96
    %v878 = vpop.permute.xlu0 %877
    %879 = vrot.lane.b32.xlu0 %v532, 96
    %v880 = vpop.permute.xlu0 %879
    %881 = vrot.lane.b32.xlu0 %v531, 96
    %v882 = vpop.permute.xlu0 %881
    %883 = vrot.lane.b32.xlu0 %v530, 96
    %v884 = vpop.permute.xlu0 %883
    %885 = vrot.lane.b32.xlu0 %v529, 96
    %v886 = vpop.permute.xlu0 %885
    %887 = vrot.lane.b32.xlu0 %v528, 96
    %v888 = vpop.permute.xlu0 %887
    %889 = vrot.lane.b32.xlu0 %v527, 96
    %v890 = vpop.permute.xlu0 %889
    %891 = vrot.lane.b32.xlu0 %v526, 96
    %v892 = vpop.permute.xlu0 %891
    %893 = vrot.lane.b32.xlu0 %v525, 96
    %v894 = vpop.permute.xlu0 %893
    %895 = vrot.lane.b32.xlu0 %v524, 96
    %v896 = vpop.permute.xlu0 %895
    %897 = vrot.lane.b32.xlu0 %v523, 96
    %v898 = vpop.permute.xlu0 %897
    %899 = vrot.lane.b32.xlu0 %v522, 96
    %v900 = vpop.permute.xlu0 %899
    %901 = vrot.lane.b32.xlu0 %v521, 96
    %v902 = vpop.permute.xlu0 %901
    %903 = vrot.lane.b32.xlu0 %v552, 96
    %v904 = vpop.permute.xlu0 %903
    %vm937 = vcmask 261120
    %v938 = vsel %vm937, %v261, %v586
    %v939 = vsel %vm937, %v264, %v588
    %v940 = vsel %vm937, %v267, %v590
    %v941 = vsel %vm937, %v270, %v592
    %v942 = vsel %vm937, %v273, %v594
    %v943 = vsel %vm937, %v276, %v596
    %v944 = vsel %vm937, %v279, %v598
    %v945 = vsel %vm937, %v282, %v600
    %v946 = vsel %vm937, %v285, %v602
    %v947 = vsel %vm937, %v288, %v604
    %v948 = vsel %vm937, %v291, %v606
    %v949 = vsel %vm937, %v294, %v608
    %v950 = vsel %vm937, %v297, %v610
    %v951 = vsel %vm937, %v300, %v612
    %v952 = vsel %vm937, %v303, %v614
    %v953 = vsel %vm937, %v306, %v616
    %v954 = vsel %vm937, %v309, %v618
    %v955 = vsel %vm937, %v312, %v620
    %v956 = vsel %vm937, %v315, %v622
    %v957 = vsel %vm937, %v318, %v624
    %v958 = vsel %vm937, %v321, %v626
    %v959 = vsel %vm937, %v324, %v628
    %v960 = vsel %vm937, %v327, %v630
    %v961 = vsel %vm937, %v330, %v632
    %v962 = vsel %vm937, %v333, %v634
    %v963 = vsel %vm937, %v336, %v636
    %v964 = vsel %vm937, %v339, %v638
    %v965 = vsel %vm937, %v342, %v640
    %v966 = vsel %vm937, %v345, %v642
    %v967 = vsel %vm937, %v348, %v644
    %v968 = vsel %vm937, %v351, %v646
    %v969 = vsel %vm937, %v354, %v648
    %vm970 = vcmask 523264
    %v971 = vsel %vm970, %v938, %v714
    %v972 = vsel %vm970, %v939, %v716
    %v973 = vsel %vm970, %v940, %v718
    %v974 = vsel %vm970, %v941, %v720
    %v975 = vsel %vm970, %v942, %v722
    %v976 = vsel %vm970, %v943, %v724
    %v977 = vsel %vm970, %v944, %v726
    %v978 = vsel %vm970, %v945, %v728
    %v979 = vsel %vm970, %v946, %v730
    %v980 = vsel %vm970, %v947, %v732
    %v981 = vsel %vm970, %v948, %v734
    %v982 = vsel %vm970, %v949, %v736
    %v983 = vsel %vm970, %v950, %v738
    %v984 = vsel %vm970, %v951, %v740
    %v985 = vsel %vm970, %v952, %v742
    %v986 = vsel %vm970, %v953, %v744
    %v987 = vsel %vm970, %v954, %v746
    %v988 = vsel %vm970, %v955, %v748
    %v989 = vsel %vm970, %v956, %v750
    %v990 = vsel %vm970, %v957, %v752
    %v991 = vsel %vm970, %v958, %v754
    %v992 = vsel %vm970, %v959, %v756
    %v993 = vsel %vm970, %v960, %v758
    %v994 = vsel %vm970, %v961, %v760
    %v995 = vsel %vm970, %v962, %v762
    %v996 = vsel %vm970, %v963, %v764
    %v997 = vsel %vm970, %v964, %v766
    %v998 = vsel %vm970, %v965, %v768
    %v999 = vsel %vm970, %v966, %v770
    %v1000 = vsel %vm970, %v967, %v772
    %v1001 = vsel %vm970, %v968, %v774
    %v1002 = vsel %vm970, %v969, %v776
    %vm1003 = vcmask 785408
    %v1004 = vsel %vm1003, %v971, %v842
    %v1005 = vsel %vm1003, %v972, %v844
    %v1006 = vsel %vm1003, %v973, %v846
    %v1007 = vsel %vm1003, %v974, %v848
    %v1008 = vsel %vm1003, %v975, %v850
    %v1009 = vsel %vm1003, %v976, %v852
    %v1010 = vsel %vm1003, %v977, %v854
    %v1011 = vsel %vm1003, %v978, %v856
    %v1012 = vsel %vm1003, %v979, %v858
    %v1013 = vsel %vm1003, %v980, %v860
    %v1014 = vsel %vm1003, %v981, %v862
    %v1015 = vsel %vm1003, %v982, %v864
    %v1016 = vsel %vm1003, %v983, %v866
    %v1017 = vsel %vm1003, %v984, %v868
    %v1018 = vsel %vm1003, %v985, %v870
    %v1019 = vsel %vm1003, %v986, %v872
    %v1020 = vsel %vm1003, %v987, %v874
    %v1021 = vsel %vm1003, %v988, %v876
    %v1022 = vsel %vm1003, %v989, %v878
    %v1023 = vsel %vm1003, %v990, %v880
    %v1024 = vsel %vm1003, %v991, %v882
    %v1025 = vsel %vm1003, %v992, %v884
    %v1026 = vsel %vm1003, %v993, %v886
    %v1027 = vsel %vm1003, %v994, %v888
    %v1028 = vsel %vm1003, %v995, %v890
    %v1029 = vsel %vm1003, %v996, %v892
    %v1030 = vsel %vm1003, %v997, %v894
    %v1031 = vsel %vm1003, %v998, %v896
    %v1032 = vsel %vm1003, %v999, %v898
    %v1033 = vsel %vm1003, %v1000, %v900
    %v1034 = vsel %vm1003, %v1001, %v902
    %v1035 = vsel %vm1003, %v1002, %v904
    %v1036 = vpack.c.bf16 %v1005, %v1004
    %v1037 = vpack.c.bf16 %v1007, %v1006
    %v1038 = vpack.c.bf16 %v1009, %v1008
    %v1039 = vpack.c.bf16 %v1011, %v1010
    %v1040 = vpack.c.bf16 %v1013, %v1012
    %v1041 = vpack.c.bf16 %v1015, %v1014
    %v1042 = vpack.c.bf16 %v1017, %v1016
    %v1043 = vpack.c.bf16 %v1019, %v1018
    %v1044 = vpack.c.bf16 %v1021, %v1020
    %v1045 = vpack.c.bf16 %v1023, %v1022
    %v1046 = vpack.c.bf16 %v1025, %v1024
    %v1047 = vpack.c.bf16 %v1027, %v1026
    %v1048 = vpack.c.bf16 %v1029, %v1028
    %v1049 = vpack.c.bf16 %v1031, %v1030
    %v1050 = vpack.c.bf16 %v1033, %v1032
    %v1051 = vpack.c.bf16 %v1035, %v1034
    %v1052 = vld [vmem:[%s1 + $0x20] sm:$0xff]
    %v1053 = vld [vmem:[%s1 + $0x28] sm:$0xff]
    %v1054 = vpack.c.bf16 %v1053, %v1052
    %v1055 = vld [vmem:[%s1 + $0x48] sm:$0x1]
    %v1056 = vperm.slane %v1055, 0
    %1057 = vmatpush.bf16.xpose.msra.mxu0 0
    %1058 = vmatpush.bf16.xpose.msra.mxu0 0
    %1059 = vmatpush.bf16.xpose.msra.mxu0 0
    %1060 = vmatpush.bf16.xpose.msra.mxu0 0
    %1061 = vmatpush.bf16.xpose.msra.mxu0 0
    %1062 = vmatpush.bf16.xpose.msra.mxu0 0
    %1063 = vmatpush.bf16.xpose.msra.mxu0 0
    %1064 = vmatpush.bf16.xpose.msra.mxu0 %v1054
    %1065 = vmatmul.bf16.gmra.mxu0 %v1036
    %v1066 = vpop.f32.mrf.mxu0
    %v1067 = vadd.f32 %v1056, %v1066
    %v1068 = vpop.f32.mrf.mxu0
    %v1069 = vadd.f32 %v1056, %v1068
    %1070 = vmatmul.bf16.gmra.mxu0 %v1037
    %v1071 = vpop.f32.mrf.mxu0
    %v1072 = vadd.f32 %v1056, %v1071
    %v1073 = vpop.f32.mrf.mxu0
    %v1074 = vadd.f32 %v1056, %v1073
    %1075 = vmatmul.bf16.gmra.mxu0 %v1038
    %v1076 = vpop.f32.mrf.mxu0
    %v1077 = vadd.f32 %v1056, %v1076
    %v1078 = vpop.f32.mrf.mxu0
    %v1079 = vadd.f32 %v1056, %v1078
    %1080 = vmatmul.bf16.gmra.mxu0 %v1039
    %v1081 = vpop.f32.mrf.mxu0
    %v1082 = vadd.f32 %v1056, %v1081
    %v1083 = vpop.f32.mrf.mxu0
    %v1084 = vadd.f32 %v1056, %v1083
    %1085 = vmatmul.bf16.gmra.mxu0 %v1040
    %v1086 = vpop.f32.mrf.mxu0
    %v1087 = vadd.f32 %v1056, %v1086
    %v1088 = vpop.f32.mrf.mxu0
    %v1089 = vadd.f32 %v1056, %v1088
    %1090 = vmatmul.bf16.gmra.mxu0 %v1041
    %v1091 = vpop.f32.mrf.mxu0
    %v1092 = vadd.f32 %v1056, %v1091
    %v1093 = vpop.f32.mrf.mxu0
    %v1094 = vadd.f32 %v1056, %v1093
    %1095 = vmatmul.bf16.gmra.mxu0 %v1042
    %v1096 = vpop.f32.mrf.mxu0
    %v1097 = vadd.f32 %v1056, %v1096
    %v1098 = vpop.f32.mrf.mxu0
    %v1099 = vadd.f32 %v1056, %v1098
    %1100 = vmatmul.bf16.gmra.mxu0 %v1043
    %v1101 = vpop.f32.mrf.mxu0
    %v1102 = vadd.f32 %v1056, %v1101
    %v1103 = vpop.f32.mrf.mxu0
    %v1104 = vadd.f32 %v1056, %v1103
    %1105 = vmatmul.bf16.gmra.mxu0 %v1044
    %v1106 = vpop.f32.mrf.mxu0
    %v1107 = vadd.f32 %v1056, %v1106
    %v1108 = vpop.f32.mrf.mxu0
    %v1109 = vadd.f32 %v1056, %v1108
    %1110 = vmatmul.bf16.gmra.mxu0 %v1045
    %v1111 = vpop.f32.mrf.mxu0
    %v1112 = vadd.f32 %v1056, %v1111
    %v1113 = vpop.f32.mrf.mxu0
    %v1114 = vadd.f32 %v1056, %v1113
    %1115 = vmatmul.bf16.gmra.mxu0 %v1046
    %v1116 = vpop.f32.mrf.mxu0
    %v1117 = vadd.f32 %v1056, %v1116
    %v1118 = vpop.f32.mrf.mxu0
    %v1119 = vadd.f32 %v1056, %v1118
    %1120 = vmatmul.bf16.gmra.mxu0 %v1047
    %v1121 = vpop.f32.mrf.mxu0
    %v1122 = vadd.f32 %v1056, %v1121
    %v1123 = vpop.f32.mrf.mxu0
    %v1124 = vadd.f32 %v1056, %v1123
    %1125 = vmatmul.bf16.gmra.mxu0 %v1048
    %v1126 = vpop.f32.mrf.mxu0
    %v1127 = vadd.f32 %v1056, %v1126
    %v1128 = vpop.f32.mrf.mxu0
    %v1129 = vadd.f32 %v1056, %v1128
    %1130 = vmatmul.bf16.gmra.mxu0 %v1049
    %v1131 = vpop.f32.mrf.mxu0
    %v1132 = vadd.f32 %v1056, %v1131
    %v1133 = vpop.f32.mrf.mxu0
    %v1134 = vadd.f32 %v1056, %v1133
    %1135 = vmatmul.bf16.gmra.mxu0 %v1050
    %v1136 = vpop.f32.mrf.mxu0
    %v1137 = vadd.f32 %v1056, %v1136
    %v1138 = vpop.f32.mrf.mxu0
    %v1139 = vadd.f32 %v1056, %v1138
    %1140 = vmatmul.bf16.gmra.mxu0 %v1051
    %v1141 = vpop.f32.mrf.mxu0
    %v1142 = vadd.f32 %v1056, %v1141
    %v1143 = vpop.f32.mrf.mxu0
    %v1144 = vadd.f32 %v1056, %v1143
    %1145 = vdwg.mxu0
    %v1146 = vmax.f32 %v1067, 0.0
    %v1147 = vmax.f32 %v1069, 0.0
    %v1148 = vmax.f32 %v1072, 0.0
    %v1149 = vmax.f32 %v1074, 0.0
    %v1150 = vmax.f32 %v1077, 0.0
    %v1151 = vmax.f32 %v1079, 0.0
    %v1152 = vmax.f32 %v1082, 0.0
    %v1153 = vmax.f32 %v1084, 0.0
    %v1154 = vmax.f32 %v1087, 0.0
    %v1155 = vmax.f32 %v1089, 0.0
    %v1156 = vmax.f32 %v1092, 0.0
    %v1157 = vmax.f32 %v1094, 0.0
    %v1158 = vmax.f32 %v1097, 0.0
    %v1159 = vmax.f32 %v1099, 0.0
    %v1160 = vmax.f32 %v1102, 0.0
    %v1161 = vmax.f32 %v1104, 0.0
    %v1162 = vmax.f32 %v1107, 0.0
    %v1163 = vmax.f32 %v1109, 0.0
    %v1164 = vmax.f32 %v1112, 0.0
    %v1165 = vmax.f32 %v1114, 0.0
    %v1166 = vmax.f32 %v1117, 0.0
    %v1167 = vmax.f32 %v1119, 0.0
    %v1168 = vmax.f32 %v1122, 0.0
    %v1169 = vmax.f32 %v1124, 0.0
    %v1170 = vmax.f32 %v1127, 0.0
    %v1171 = vmax.f32 %v1129, 0.0
    %v1172 = vmax.f32 %v1132, 0.0
    %v1173 = vmax.f32 %v1134, 0.0
    %v1174 = vmax.f32 %v1137, 0.0
    %v1175 = vmax.f32 %v1139, 0.0
    %v1176 = vmax.f32 %v1142, 0.0
    %v1177 = vmax.f32 %v1144, 0.0
    %v1178 = vld [vmem:[%s1 + $0x40] sm:$0xff]
    %v1179 = vmul.f32 %v1146, %v1178
    %v1180 = vmul.f32 %v1147, %v1178
    %v1181 = vmul.f32 %v1148, %v1178
    %v1182 = vmul.f32 %v1149, %v1178
    %v1183 = vmul.f32 %v1150, %v1178
    %v1184 = vmul.f32 %v1151, %v1178
    %v1185 = vmul.f32 %v1152, %v1178
    %v1186 = vmul.f32 %v1153, %v1178
    %v1187 = vmul.f32 %v1154, %v1178
    %v1188 = vmul.f32 %v1155, %v1178
    %v1189 = vmul.f32 %v1156, %v1178
    %v1190 = vmul.f32 %v1157, %v1178
    %v1191 = vmul.f32 %v1158, %v1178
    %v1192 = vmul.f32 %v1159, %v1178
    %v1193 = vmul.f32 %v1160, %v1178
    %v1194 = vmul.f32 %v1161, %v1178
    %v1195 = vmul.f32 %v1162, %v1178
    %v1196 = vmul.f32 %v1163, %v1178
    %v1197 = vmul.f32 %v1164, %v1178
    %v1198 = vmul.f32 %v1165, %v1178
    %v1199 = vmul.f32 %v1166, %v1178
    %v1200 = vmul.f32 %v1167, %v1178
    %v1201 = vmul.f32 %v1168, %v1178
    %v1202 = vmul.f32 %v1169, %v1178
    %v1203 = vmul.f32 %v1170, %v1178
    %v1204 = vmul.f32 %v1171, %v1178
    %v1205 = vmul.f32 %v1172, %v1178
    %v1206 = vmul.f32 %v1173, %v1178
    %v1207 = vmul.f32 %v1174, %v1178
    %v1208 = vmul.f32 %v1175, %v1178
    %v1209 = vmul.f32 %v1176, %v1178
    %v1210 = vmul.f32 %v1177, %v1178
    %vm1211 = vcmask 130048
    %v1212 = vsel %vm1211, %v1179, -inf
    %v1213 = vrot.slane %v1212, 4
    %v1214 = vmax.f32 %v1212, %v1213
    %v1215 = vrot.slane %v1214, 2
    %v1216 = vmax.f32 %v1214, %v1215
    %v1217 = vrot.slane %v1216, 1
    %v1218 = vmax.f32 %v1216, %v1217
    %v1219 = vsel %vm1211, %v1180, -inf
    %v1220 = vrot.slane %v1219, 4
    %v1221 = vmax.f32 %v1219, %v1220
    %v1222 = vrot.slane %v1221, 2
    %v1223 = vmax.f32 %v1221, %v1222
    %v1224 = vrot.slane %v1223, 1
    %v1225 = vmax.f32 %v1223, %v1224
    %v1226 = vsel %vm1211, %v1181, -inf
    %v1227 = vrot.slane %v1226, 4
    %v1228 = vmax.f32 %v1226, %v1227
    %v1229 = vrot.slane %v1228, 2
    %v1230 = vmax.f32 %v1228, %v1229
    %v1231 = vrot.slane %v1230, 1
    %v1232 = vmax.f32 %v1230, %v1231
    %v1233 = vsel %vm1211, %v1182, -inf
    %v1234 = vrot.slane %v1233, 4
    %v1235 = vmax.f32 %v1233, %v1234
    %v1236 = vrot.slane %v1235, 2
    %v1237 = vmax.f32 %v1235, %v1236
    %v1238 = vrot.slane %v1237, 1
    %v1239 = vmax.f32 %v1237, %v1238
    %v1240 = vsel %vm1211, %v1183, -inf
    %v1241 = vrot.slane %v1240, 4
    %v1242 = vmax.f32 %v1240, %v1241
    %v1243 = vrot.slane %v1242, 2
    %v1244 = vmax.f32 %v1242, %v1243
    %v1245 = vrot.slane %v1244, 1
    %v1246 = vmax.f32 %v1244, %v1245
    %v1247 = vsel %vm1211, %v1184, -inf
    %v1248 = vrot.slane %v1247, 4
    %v1249 = vmax.f32 %v1247, %v1248
    %v1250 = vrot.slane %v1249, 2
    %v1251 = vmax.f32 %v1249, %v1250
    %v1252 = vrot.slane %v1251, 1
    %v1253 = vmax.f32 %v1251, %v1252
    %v1254 = vsel %vm1211, %v1185, -inf
    %v1255 = vrot.slane %v1254, 4
    %v1256 = vmax.f32 %v1254, %v1255
    %v1257 = vrot.slane %v1256, 2
    %v1258 = vmax.f32 %v1256, %v1257
    %v1259 = vrot.slane %v1258, 1
    %v1260 = vmax.f32 %v1258, %v1259
    %v1261 = vsel %vm1211, %v1186, -inf
    %v1262 = vrot.slane %v1261, 4
    %v1263 = vmax.f32 %v1261, %v1262
    %v1264 = vrot.slane %v1263, 2
    %v1265 = vmax.f32 %v1263, %v1264
    %v1266 = vrot.slane %v1265, 1
    %v1267 = vmax.f32 %v1265, %v1266
    %v1268 = vsel %vm1211, %v1187, -inf
    %v1269 = vrot.slane %v1268, 4
    %v1270 = vmax.f32 %v1268, %v1269
    %v1271 = vrot.slane %v1270, 2
    %v1272 = vmax.f32 %v1270, %v1271
    %v1273 = vrot.slane %v1272, 1
    %v1274 = vmax.f32 %v1272, %v1273
    %v1275 = vsel %vm1211, %v1188, -inf
    %v1276 = vrot.slane %v1275, 4
    %v1277 = vmax.f32 %v1275, %v1276
    %v1278 = vrot.slane %v1277, 2
    %v1279 = vmax.f32 %v1277, %v1278
    %v1280 = vrot.slane %v1279, 1
    %v1281 = vmax.f32 %v1279, %v1280
    %v1282 = vsel %vm1211, %v1189, -inf
    %v1283 = vrot.slane %v1282, 4
    %v1284 = vmax.f32 %v1282, %v1283
    %v1285 = vrot.slane %v1284, 2
    %v1286 = vmax.f32 %v1284, %v1285
    %v1287 = vrot.slane %v1286, 1
    %v1288 = vmax.f32 %v1286, %v1287
    %v1289 = vsel %vm1211, %v1190, -inf
    %v1290 = vrot.slane %v1289, 4
    %v1291 = vmax.f32 %v1289, %v1290
    %v1292 = vrot.slane %v1291, 2
    %v1293 = vmax.f32 %v1291, %v1292
    %v1294 = vrot.slane %v1293, 1
    %v1295 = vmax.f32 %v1293, %v1294
    %v1296 = vsel %vm1211, %v1191, -inf
    %v1297 = vrot.slane %v1296, 4
    %v1298 = vmax.f32 %v1296, %v1297
    %v1299 = vrot.slane %v1298, 2
    %v1300 = vmax.f32 %v1298, %v1299
    %v1301 = vrot.slane %v1300, 1
    %v1302 = vmax.f32 %v1300, %v1301
    %v1303 = vsel %vm1211, %v1192, -inf
    %v1304 = vrot.slane %v1303, 4
    %v1305 = vmax.f32 %v1303, %v1304
    %v1306 = vrot.slane %v1305, 2
    %v1307 = vmax.f32 %v1305, %v1306
    %v1308 = vrot.slane %v1307, 1
    %v1309 = vmax.f32 %v1307, %v1308
    %v1310 = vsel %vm1211, %v1193, -inf
    %v1311 = vrot.slane %v1310, 4
    %v1312 = vmax.f32 %v1310, %v1311
    %v1313 = vrot.slane %v1312, 2
    %v1314 = vmax.f32 %v1312, %v1313
    %v1315 = vrot.slane %v1314, 1
    %v1316 = vmax.f32 %v1314, %v1315
    %v1317 = vsel %vm1211, %v1194, -inf
    %v1318 = vrot.slane %v1317, 4
    %v1319 = vmax.f32 %v1317, %v1318
    %v1320 = vrot.slane %v1319, 2
    %v1321 = vmax.f32 %v1319, %v1320
    %v1322 = vrot.slane %v1321, 1
    %v1323 = vmax.f32 %v1321, %v1322
    %v1324 = vsel %vm1211, %v1195, -inf
    %v1325 = vrot.slane %v1324, 4
    %v1326 = vmax.f32 %v1324, %v1325
    %v1327 = vrot.slane %v1326, 2
    %v1328 = vmax.f32 %v1326, %v1327
    %v1329 = vrot.slane %v1328, 1
    %v1330 = vmax.f32 %v1328, %v1329
    %v1331 = vsel %vm1211, %v1196, -inf
    %v1332 = vrot.slane %v1331, 4
    %v1333 = vmax.f32 %v1331, %v1332
    %v1334 = vrot.slane %v1333, 2
    %v1335 = vmax.f32 %v1333, %v1334
    %v1336 = vrot.slane %v1335, 1
    %v1337 = vmax.f32 %v1335, %v1336
    %v1338 = vsel %vm1211, %v1197, -inf
    %v1339 = vrot.slane %v1338, 4
    %v1340 = vmax.f32 %v1338, %v1339
    %v1341 = vrot.slane %v1340, 2
    %v1342 = vmax.f32 %v1340, %v1341
    %v1343 = vrot.slane %v1342, 1
    %v1344 = vmax.f32 %v1342, %v1343
    %v1345 = vsel %vm1211, %v1198, -inf
    %v1346 = vrot.slane %v1345, 4
    %v1347 = vmax.f32 %v1345, %v1346
    %v1348 = vrot.slane %v1347, 2
    %v1349 = vmax.f32 %v1347, %v1348
    %v1350 = vrot.slane %v1349, 1
    %v1351 = vmax.f32 %v1349, %v1350
    %v1352 = vsel %vm1211, %v1199, -inf
    %v1353 = vrot.slane %v1352, 4
    %v1354 = vmax.f32 %v1352, %v1353
    %v1355 = vrot.slane %v1354, 2
    %v1356 = vmax.f32 %v1354, %v1355
    %v1357 = vrot.slane %v1356, 1
    %v1358 = vmax.f32 %v1356, %v1357
    %v1359 = vsel %vm1211, %v1200, -inf
    %v1360 = vrot.slane %v1359, 4
    %v1361 = vmax.f32 %v1359, %v1360
    %v1362 = vrot.slane %v1361, 2
    %v1363 = vmax.f32 %v1361, %v1362
    %v1364 = vrot.slane %v1363, 1
    %v1365 = vmax.f32 %v1363, %v1364
    %v1366 = vsel %vm1211, %v1201, -inf
    %v1367 = vrot.slane %v1366, 4
    %v1368 = vmax.f32 %v1366, %v1367
    %v1369 = vrot.slane %v1368, 2
    %v1370 = vmax.f32 %v1368, %v1369
    %v1371 = vrot.slane %v1370, 1
    %v1372 = vmax.f32 %v1370, %v1371
    %v1373 = vsel %vm1211, %v1202, -inf
    %v1374 = vrot.slane %v1373, 4
    %v1375 = vmax.f32 %v1373, %v1374
    %v1376 = vrot.slane %v1375, 2
    %v1377 = vmax.f32 %v1375, %v1376
    %v1378 = vrot.slane %v1377, 1
    %v1379 = vmax.f32 %v1377, %v1378
    %v1380 = vsel %vm1211, %v1203, -inf
    %v1381 = vrot.slane %v1380, 4
    %v1382 = vmax.f32 %v1380, %v1381
    %v1383 = vrot.slane %v1382, 2
    %v1384 = vmax.f32 %v1382, %v1383
    %v1385 = vrot.slane %v1384, 1
    %v1386 = vmax.f32 %v1384, %v1385
    %v1387 = vsel %vm1211, %v1204, -inf
    %v1388 = vrot.slane %v1387, 4
    %v1389 = vmax.f32 %v1387, %v1388
    %v1390 = vrot.slane %v1389, 2
    %v1391 = vmax.f32 %v1389, %v1390
    %v1392 = vrot.slane %v1391, 1
    %v1393 = vmax.f32 %v1391, %v1392
    %v1394 = vsel %vm1211, %v1205, -inf
    %v1395 = vrot.slane %v1394, 4
    %v1396 = vmax.f32 %v1394, %v1395
    %v1397 = vrot.slane %v1396, 2
    %v1398 = vmax.f32 %v1396, %v1397
    %v1399 = vrot.slane %v1398, 1
    %v1400 = vmax.f32 %v1398, %v1399
    %v1401 = vsel %vm1211, %v1206, -inf
    %v1402 = vrot.slane %v1401, 4
    %v1403 = vmax.f32 %v1401, %v1402
    %v1404 = vrot.slane %v1403, 2
    %v1405 = vmax.f32 %v1403, %v1404
    %v1406 = vrot.slane %v1405, 1
    %v1407 = vmax.f32 %v1405, %v1406
    %v1408 = vsel %vm1211, %v1207, -inf
    %v1409 = vrot.slane %v1408, 4
    %v1410 = vmax.f32 %v1408, %v1409
    %v1411 = vrot.slane %v1410, 2
    %v1412 = vmax.f32 %v1410, %v1411
    %v1413 = vrot.slane %v1412, 1
    %v1414 = vmax.f32 %v1412, %v1413
    %v1415 = vsel %vm1211, %v1208, -inf
    %v1416 = vrot.slane %v1415, 4
    %v1417 = vmax.f32 %v1415, %v1416
    %v1418 = vrot.slane %v1417, 2
    %v1419 = vmax.f32 %v1417, %v1418
    %v1420 = vrot.slane %v1419, 1
    %v1421 = vmax.f32 %v1419, %v1420
    %v1422 = vsel %vm1211, %v1209, -inf
    %v1423 = vrot.slane %v1422, 4
    %v1424 = vmax.f32 %v1422, %v1423
    %v1425 = vrot.slane %v1424, 2
    %v1426 = vmax.f32 %v1424, %v1425
    %v1427 = vrot.slane %v1426, 1
    %v1428 = vmax.f32 %v1426, %v1427
    %v1429 = vsel %vm1211, %v1210, -inf
    %v1430 = vrot.slane %v1429, 4
    %v1431 = vmax.f32 %v1429, %v1430
    %v1432 = vrot.slane %v1431, 2
    %v1433 = vmax.f32 %v1431, %v1432
    %v1434 = vrot.slane %v1433, 1
    %v1435 = vmax.f32 %v1433, %v1434
    %v1436 = vld [vmem:[%s1 + $0x30] sm:$0xff]
    %v1437 = vld [vmem:[%s1 + $0x38] sm:$0xff]
    %v1438 = vpack.c.bf16 %v1437, %v1436
    %v1439 = vld [vmem:[%s1 + $0x49] sm:$0x1]
    %v1440 = vpack.c.bf16 %v1218, %v1218
    %v1441 = vpack.c.bf16 %v1225, %v1225
    %v1442 = vpack.c.bf16 %v1232, %v1232
    %v1443 = vpack.c.bf16 %v1239, %v1239
    %v1444 = vpack.c.bf16 %v1246, %v1246
    %v1445 = vpack.c.bf16 %v1253, %v1253
    %v1446 = vpack.c.bf16 %v1260, %v1260
    %v1447 = vpack.c.bf16 %v1267, %v1267
    %v1448 = vpack.c.bf16 %v1274, %v1274
    %v1449 = vpack.c.bf16 %v1281, %v1281
    %v1450 = vpack.c.bf16 %v1288, %v1288
    %v1451 = vpack.c.bf16 %v1295, %v1295
    %v1452 = vpack.c.bf16 %v1302, %v1302
    %v1453 = vpack.c.bf16 %v1309, %v1309
    %v1454 = vpack.c.bf16 %v1316, %v1316
    %v1455 = vpack.c.bf16 %v1323, %v1323
    %v1456 = vpack.c.bf16 %v1330, %v1330
    %v1457 = vpack.c.bf16 %v1337, %v1337
    %v1458 = vpack.c.bf16 %v1344, %v1344
    %v1459 = vpack.c.bf16 %v1351, %v1351
    %v1460 = vpack.c.bf16 %v1358, %v1358
    %v1461 = vpack.c.bf16 %v1365, %v1365
    %v1462 = vpack.c.bf16 %v1372, %v1372
    %v1463 = vpack.c.bf16 %v1379, %v1379
    %v1464 = vpack.c.bf16 %v1386, %v1386
    %v1465 = vpack.c.bf16 %v1393, %v1393
    %v1466 = vpack.c.bf16 %v1400, %v1400
    %v1467 = vpack.c.bf16 %v1407, %v1407
    %v1468 = vpack.c.bf16 %v1414, %v1414
    %v1469 = vpack.c.bf16 %v1421, %v1421
    %v1470 = vpack.c.bf16 %v1428, %v1428
    %v1471 = vpack.c.bf16 %v1435, %v1435
    %v1472 = vperm.slane %v1439, 0
    %v1505 = vunpack.c.l.b16 %v1440
    %v1506 = vunpack.c.l.b16 %v1441
    %v1507 = vunpack.c.l.b16 %v1442
    %v1508 = vunpack.c.l.b16 %v1443
    %v1509 = vunpack.c.l.b16 %v1444
    %v1510 = vunpack.c.l.b16 %v1445
    %v1511 = vunpack.c.l.b16 %v1446
    %v1512 = vunpack.c.l.b16 %v1447
    %v1513 = vunpack.c.l.b16 %v1448
    %v1514 = vunpack.c.l.b16 %v1449
    %v1515 = vunpack.c.l.b16 %v1450
    %v1516 = vunpack.c.l.b16 %v1451
    %v1517 = vunpack.c.l.b16 %v1452
    %v1518 = vunpack.c.l.b16 %v1453
    %v1519 = vunpack.c.l.b16 %v1454
    %v1520 = vunpack.c.l.b16 %v1455
    %v1521 = vunpack.c.l.b16 %v1456
    %v1522 = vunpack.c.l.b16 %v1457
    %v1523 = vunpack.c.l.b16 %v1458
    %v1524 = vunpack.c.l.b16 %v1459
    %v1525 = vunpack.c.l.b16 %v1460
    %v1526 = vunpack.c.l.b16 %v1461
    %v1527 = vunpack.c.l.b16 %v1462
    %v1528 = vunpack.c.l.b16 %v1463
    %v1529 = vunpack.c.l.b16 %v1464
    %v1530 = vunpack.c.l.b16 %v1465
    %v1531 = vunpack.c.l.b16 %v1466
    %v1532 = vunpack.c.l.b16 %v1467
    %v1533 = vunpack.c.l.b16 %v1468
    %v1534 = vunpack.c.l.b16 %v1469
    %v1535 = vunpack.c.l.b16 %v1470
    %v1536 = vunpack.c.l.b16 %v1471
    %vm1537 = vcmask 1041409
    %v1538 = vsel %vm1537, %v1506, %v1505
    %vm1539 = vcmask 1042434
    %v1540 = vsel %vm1539, %v1507, %v1538
    %vm1541 = vcmask 1043459
    %v1542 = vsel %vm1541, %v1508, %v1540
    %vm1543 = vcmask 1044484
    %v1544 = vsel %vm1543, %v1509, %v1542
    %vm1545 = vcmask 1045509
    %v1546 = vsel %vm1545, %v1510, %v1544
    %vm1547 = vcmask 1046534
    %v1548 = vsel %vm1547, %v1511, %v1546
    %vm1549 = vcmask 1047559
    %v1550 = vsel %vm1549, %v1512, %v1548
    %v1551 = vsel %vm1537, %v1514, %v1513
    %v1552 = vsel %vm1539, %v1515, %v1551
    %v1553 = vsel %vm1541, %v1516, %v1552
    %v1554 = vsel %vm1543, %v1517, %v1553
    %v1555 = vsel %vm1545, %v1518, %v1554
    %v1556 = vsel %vm1547, %v1519, %v1555
    %v1557 = vsel %vm1549, %v1520, %v1556
    %v1558 = vsel %vm1537, %v1522, %v1521
    %v1559 = vsel %vm1539, %v1523, %v1558
    %v1560 = vsel %vm1541, %v1524, %v1559
    %v1561 = vsel %vm1543, %v1525, %v1560
    %v1562 = vsel %vm1545, %v1526, %v1561
    %v1563 = vsel %vm1547, %v1527, %v1562
    %v1564 = vsel %vm1549, %v1528, %v1563
    %v1565 = vsel %vm1537, %v1530, %v1529
    %v1566 = vsel %vm1539, %v1531, %v1565
    %v1567 = vsel %vm1541, %v1532, %v1566
    %v1568 = vsel %vm1543, %v1533, %v1567
    %v1569 = vsel %vm1545, %v1534, %v1568
    %v1570 = vsel %vm1547, %v1535, %v1569
    %v1571 = vsel %vm1549, %v1536, %v1570
    %v1572 = vpack.c.b16 %v1557, %v1550
    %v1573 = vpack.c.b16 %v1571, %v1564
    %v1575 = vsel %vm1211, %v1572, 0
    %v1578 = vsel %vm1211, %v1573, 0
    %1580 = vmatpush.bf16.msra.mxu0 0
    %1581 = vmatpush.bf16.msra.mxu0 0
    %1582 = vmatpush.bf16.msra.mxu0 0
    %1583 = vmatpush.bf16.msra.mxu0 0
    %1584 = vmatpush.bf16.msra.mxu0 0
    %1585 = vmatpush.bf16.msra.mxu0 0
    %1586 = vmatpush.bf16.msra.mxu0 0
    %1587 = vmatpush.bf16.msra.mxu0 %v1438
    %1588 = vmatmul.bf16.gmra.mxu0 %v1575
    %v1589 = vpop.f32.mrf.mxu0
    %v1590 = vadd.f32 %v1472, %v1589
    %v1591 = vpop.f32.mrf.mxu0
    %v1592 = vadd.f32 %v1472, %v1591
    %1593 = vmatmul.bf16.gmra.mxu0 %v1578
    %v1594 = vpop.f32.mrf.mxu0
    %v1595 = vadd.f32 %v1472, %v1594
    %v1596 = vpop.f32.mrf.mxu0
    %v1597 = vadd.f32 %v1472, %v1596
    %1598 = vdwg.mxu0
    %1599 = vst [vmem:[#allocation2] sm:$0xff] %v1590
    %1600 = vst [vmem:[#allocation2 + $0x8] sm:$0xff] %v1592
    %1601 = vst [vmem:[#allocation2 + $0x10] sm:$0xff] %v1595
    %1602 = vst [vmem:[#allocation2 + $0x18] sm:$0xff] %v1597
    // Predicated region
    $region10: #{tpu_custom_call.1} parent=1 // pred_check
      _
    $region11: #{tpu_custom_call.1} parent=1 // pred_check_branch
      %1604 = sbr.rel (0) target = $region13
    $region12: #{tpu_custom_call.1} parent=1 // pred_region
      %1606 = vsyncadd [#allocation3], 0
      %s1607 = sshll.u32 [#allocation2], 4
      %s1608 = int_to_ptr.vmem [resolvable:$true] %s1607
      %s1609 = sshll.u32 %s2, 4
      %s1610 = int_to_ptr.hbm [resolvable:$true] %s1609
      %1615 = dma.vmem_to_hbm [thread:$0]  %s1608, 512, %s1610, [#allocation3], 128, 128, 8
    $region13: #{tpu_custom_call.1} parent=1 // pred_fallthru
      _
    // Predicated region
    $region14: #{tpu_custom_call.1} parent=1 // pred_check
      _
    $region15: #{tpu_custom_call.1} parent=1 // pred_check_branch
      %1617 = sbr.rel (0) target = $region17
    $region16: #{tpu_custom_call.1} parent=1 // pred_region
      %1619 = dma.done [#allocation3], 512
    $region17: #{tpu_custom_call.1} parent=1 // pred_fallthru
      _
    %1620 = vsyncpa [#allocation3], 1

</llo_original>
